<compile_context>
chip_gen: v7x
topology: tpu7x:2x2x1
jax: 0.10.0
libtpu: 0.0.40
codegen_flags: <defaults>
</compile_context>

<pallas_src>
import functools

import jax
import jax.numpy as jnp
from jax.experimental import pallas as pl
from jax.experimental.pallas import tpu as pltpu


def _choose_tiling(B, C, L, itemsize):
    """Pick lane tile TL (multiple of 128), grid size, and a VMEM limit."""
    try:
        vmem = int(pltpu.get_tpu_info().vmem_capacity_bytes)
    except Exception:
        vmem = 64 << 20  # conservative fallback
    # Heuristic: 64 MiB-per-core VMEM => v7x-class chip with 2 TensorCores.
    num_cores = 2 if vmem < (96 << 20) else 1

    # Bytes per lane-column of one grid step, across all live buffers:
    #   2x double-buffered input block + 2x output block (input dtype)
    #   + ~3 f32-sized temporaries (x, x-mean, y) the body materializes.
    per_lane = B * C * (4 * itemsize + 3 * 4)
    cap = max(128, (int(0.65 * vmem) // per_lane) // 128 * 128)

    lanes_needed = ((max(L, 1) + 127) // 128) * 128
    target = 8192  # same target on every generation; VMEM cap handles the rest
    tl = max(128, (min(lanes_needed, target, cap) // 128) * 128)

    # v7x: make sure the "parallel" grid axis has >= num_cores steps so both
    # TensorCores get work (negligible cost elsewhere).
    while num_cores > 1 and pl.cdiv(L, tl) < num_cores and tl > 128:
        tl = max(128, ((tl // 2) // 128) * 128)

    grid = pl.cdiv(L, tl)

    block_bytes = B * C * tl * itemsize
    f32_bytes = B * C * tl * 4
    vmem_limit = 4 * block_bytes + 3 * f32_bytes + (4 << 20)
    vmem_limit = int(min(vmem, max(32 << 20, vmem_limit)))
    return tl, grid, vmem_limit


def _ln4d_kernel(eps, x_ref, g_ref, b_ref, o_ref):
    # x_ref / o_ref: (B, C, TL); g_ref / b_ref: (1, C, 1) float32.
    x = x_ref[...].astype(jnp.float32)                  # (B, C, TL)
    mean = jnp.mean(x, axis=1, keepdims=True)           # (B, 1, TL) sublane reduce
    xc = x - mean
    var = jnp.mean(xc * xc, axis=1, keepdims=True)      # centered => var >= 0
    rstd = jax.lax.rsqrt(var + eps)                     # EUP slot, no divide
    y = xc * rstd
    o_ref[...] = (g_ref[...] * y + b_ref[...]).astype(o_ref.dtype)


def layernorm4d_pallas(x, gamma, beta, eps=1e-5):
    B, C, H, W = x.shape
    L = H * W
    TL, grid, vmem_limit = _choose_tiling(B, C, L, x.dtype.itemsize)

    xf = x.reshape(B, C, L)
    g3 = gamma.reshape(1, C, 1).astype(jnp.float32)
    b3 = beta.reshape(1, C, 1).astype(jnp.float32)

    out = pl.pallas_call(
        functools.partial(_ln4d_kernel, eps),
        out_shape=jax.ShapeDtypeStruct((B, C, L), x.dtype),
        grid=(grid,),
        in_specs=[
            pl.BlockSpec((B, C, TL), lambda l: (0, 0, l)),
            pl.BlockSpec((1, C, 1), lambda l: (0, 0, 0)),
            pl.BlockSpec((1, C, 1), lambda l: (0, 0, 0)),
        ],
        out_specs=pl.BlockSpec((B, C, TL), lambda l: (0, 0, l)),
        compiler_params=pltpu.CompilerParams(
            dimension_semantics=("parallel",),
            vmem_limit_bytes=vmem_limit,
        ),
    )(xf, g3, b3)

    return out.reshape(B, C, H, W)


def layernorm4d_ref(x, gamma, beta, eps=1e-5):
    # Pure-JAX reference mirroring the PyTorch forward (two-pass formulation).
    u = jnp.mean(x, axis=1, keepdims=True)
    s = jnp.mean((x - u) ** 2, axis=1, keepdims=True)
    y = (x - u) / jnp.sqrt(s + eps)
    return gamma[None, :, None, None] * y + beta[None, :, None, None]


if __name__ == "__main__":
    B, C, H, W = 2, 32, 16, 16

    key = jax.random.PRNGKey(0)
    kx, kg, kb = jax.random.split(key, 3)
    x = jax.random.normal(kx, (B, C, H, W), jnp.float32)
    gamma = 1.0 + 0.1 * jax.random.normal(kg, (C,), jnp.float32)
    beta = 0.1 * jax.random.normal(kb, (C,), jnp.float32)

    fwd = jax.jit(layernorm4d_pallas)
    out = jax.block_until_ready(fwd(x, gamma, beta))

    ref = layernorm4d_ref(x, gamma, beta)
    assert out.shape == (B, C, H, W), out.shape
    assert bool(jnp.all(jnp.isfinite(out)))
    max_err = float(jnp.max(jnp.abs(out - ref)))
    assert max_err < 1e-3, max_err

    print("KERNEL_OK")
</pallas_src>

<mosaic_0001>
module attributes {stable_mosaic.version = 11 : i64} {
  func.func @_ln4d_kernel(%arg0: i32, %arg1: memref<2x32x128xf32, #tpu.memory_space<vmem>>, %arg2: memref<1x32x1xf32, #tpu.memory_space<vmem>>, %arg3: memref<1x32x1xf32, #tpu.memory_space<vmem>>, %arg4: memref<2x32x128xf32, #tpu.memory_space<vmem>>) attributes {dimension_semantics = [#tpu.dimension_semantics<parallel>], iteration_bounds = array<i64: 2>, scalar_prefetch = 0 : i64, scratch_operands = 0 : i64, tpu.core_type = #tpu.core_type<tc>, window_params = [{transform_indices = @transform_0, window_bounds = array<i64: 2, 32, 128>}, {pipeline_mode = #tpu.pipeline_mode<synchronous>, transform_indices = @transform_1, window_bounds = array<i64: 1, 32, 1>}, {pipeline_mode = #tpu.pipeline_mode<synchronous>, transform_indices = @transform_2, window_bounds = array<i64: 1, 32, 1>}, {transform_indices = @transform_3, window_bounds = array<i64: 2, 32, 128>}]} {
    %c0 = arith.constant 0 : index
    %c0_0 = arith.constant 0 : index
    %c0_1 = arith.constant 0 : index
    %0 = vector.load %arg1[%c0, %c0_0, %c0_1] : memref<2x32x128xf32, #tpu.memory_space<vmem>>, vector<2x32x128xf32>
    %cst = arith.constant dense<0.000000e+00> : vector<2x128xf32>
    %1 = vector.multi_reduction <add>, %0, %cst [1] : vector<2x32x128xf32> to vector<2x128xf32>
    %2 = vector.shape_cast %1 : vector<2x128xf32> to vector<2x1x128xf32>
    %cst_2 = arith.constant 3.200000e+01 : f32
    %3 = vector.broadcast %cst_2 : f32 to vector<2x1x128xf32>
    %4 = arith.divf %2, %3 : vector<2x1x128xf32>
    %5 = vector.broadcast %4 : vector<2x1x128xf32> to vector<2x32x128xf32>
    %6 = arith.subf %0, %5 : vector<2x32x128xf32>
    %7 = arith.mulf %6, %6 : vector<2x32x128xf32>
    %cst_3 = arith.constant dense<0.000000e+00> : vector<2x128xf32>
    %8 = vector.multi_reduction <add>, %7, %cst_3 [1] : vector<2x32x128xf32> to vector<2x128xf32>
    %9 = vector.shape_cast %8 : vector<2x128xf32> to vector<2x1x128xf32>
    %cst_4 = arith.constant 3.200000e+01 : f32
    %10 = vector.broadcast %cst_4 : f32 to vector<2x1x128xf32>
    %11 = arith.divf %9, %10 : vector<2x1x128xf32>
    %cst_5 = arith.constant 9.99999974E-6 : f32
    %12 = vector.broadcast %cst_5 : f32 to vector<2x1x128xf32>
    %13 = arith.addf %11, %12 : vector<2x1x128xf32>
    %14 = math.rsqrt %13 : vector<2x1x128xf32>
    %15 = vector.broadcast %14 : vector<2x1x128xf32> to vector<2x32x128xf32>
    %16 = arith.mulf %6, %15 : vector<2x32x128xf32>
    %c0_6 = arith.constant 0 : index
    %c0_7 = arith.constant 0 : index
    %c0_8 = arith.constant 0 : index
    %17 = vector.load %arg2[%c0_6, %c0_7, %c0_8] : memref<1x32x1xf32, #tpu.memory_space<vmem>>, vector<1x32x1xf32>
    %18 = vector.broadcast %17 : vector<1x32x1xf32> to vector<2x32x128xf32>
    %19 = arith.mulf %18, %16 : vector<2x32x128xf32>
    %c0_9 = arith.constant 0 : index
    %c0_10 = arith.constant 0 : index
    %c0_11 = arith.constant 0 : index
    %20 = vector.load %arg3[%c0_9, %c0_10, %c0_11] : memref<1x32x1xf32, #tpu.memory_space<vmem>>, vector<1x32x1xf32>
    %21 = vector.broadcast %20 : vector<1x32x1xf32> to vector<2x32x128xf32>
    %22 = arith.addf %19, %21 : vector<2x32x128xf32>
    %c0_12 = arith.constant 0 : index
    %c0_13 = arith.constant 0 : index
    %c0_14 = arith.constant 0 : index
    %23 = vector.load %arg4[%c0_12, %c0_13, %c0_14] : memref<2x32x128xf32, #tpu.memory_space<vmem>>, vector<2x32x128xf32>
    tpu.vector_store %arg4[%c0_12, %c0_13, %c0_14], %22 {strides = array<i32>} : memref<2x32x128xf32, #tpu.memory_space<vmem>>, vector<2x32x128xf32>,
    return
  }
  func.func @transform_0(%arg0: i32) -> (i32, i32, i32) {
    %c0_i32 = arith.constant 0 : i32
    %c0_i32_0 = arith.constant 0 : i32
    %c0_i32_1 = arith.constant 0 : i32
    return %c0_i32, %c0_i32_0, %arg0 : i32, i32, i32
  }
  func.func @transform_1(%arg0: i32) -> (i32, i32, i32) {
    %c0_i32 = arith.constant 0 : i32
    %c0_i32_0 = arith.constant 0 : i32
    %c0_i32_1 = arith.constant 0 : i32
    %c0_i32_2 = arith.constant 0 : i32
    return %c0_i32, %c0_i32_0, %c0_i32_1 : i32, i32, i32
  }
  func.func @transform_2(%arg0: i32) -> (i32, i32, i32) {
    %c0_i32 = arith.constant 0 : i32
    %c0_i32_0 = arith.constant 0 : i32
    %c0_i32_1 = arith.constant 0 : i32
    %c0_i32_2 = arith.constant 0 : i32
    return %c0_i32, %c0_i32_0, %c0_i32_1 : i32, i32, i32
  }
  func.func @transform_3(%arg0: i32) -> (i32, i32, i32) {
    %c0_i32 = arith.constant 0 : i32
    %c0_i32_0 = arith.constant 0 : i32
    %c0_i32_1 = arith.constant 0 : i32
    return %c0_i32, %c0_i32_0, %arg0 : i32, i32, i32
  }
}

</mosaic_0001>

<llo_original>
// kernel: layernorm4d_pallas.1
$region0: #{layernorm4d_pallas.1}
  #allocation0 [shape = 'u32[]', space=smem, size = 0x4, offset = 0x4, fixed_abs, tag = 'smem constant byte address 0x4 - core index']
  #allocation1 [shape = 'u32[144,128]{1,0:T(1,128)}', space=vmem, size = 0x12000, scoped, tag = 'internal scratch']
  %s0 = inlined_call_operand.vmem [shape: f32[2,32,256], index: 0, kind: input, shape index: {}]
  %s1 = inlined_call_operand.vmem [shape: f32[1,32,1], index: 1, kind: input, shape index: {}]
  %s2 = inlined_call_operand.vmem [shape: f32[1,32,1], index: 2, kind: input, shape index: {}]
  %s3 = inlined_call_operand.vmem [shape: f32[2,32,256], index: 3, kind: output, shape index: {}]
  %s4 = sld [smem:[#allocation0]]
  $region117: #{layernorm4d_pallas.1} parent=0
    _
  %s6 = ssub.s32 1, %s4
  %s7 = scalar_select 0, %s6, %s4
  $region1: #{layernorm4d_pallas.1} parent=0
    #allocation2 [shape = 'u8[65536]{0}', space=vmem, size = 0x10000, scoped, tag = 'input window, operand 0']
    #allocation3 [shape = 'u8[65536]{0}', space=vmem, size = 0x10000, scoped, tag = 'output window, operand 0']
    loop: start=0, step=1, limit=4
    $region2: #{layernorm4d_pallas.1} parent=1 // loop_pre_header
      _
    $region3: #{layernorm4d_pallas.1} parent=1 // loop_header
      %s9 = sphi 0, %s13
      %p10 = scmp.ge.s32.totalorder %s9, 4
      %s19 = sphi 0, %s21
      %s22 = sphi 0, %s19
      %s23 = sphi 0, %s22
      %s39 = sphi 0, %s23
      %s43 = sphi 0, %s43
      %s45 = sphi 0, %s43
      %s46 = sphi 0, %s45
      %s60 = sphi 0, %s46
      %s64 = sphi 0, %s64
      %s66 = sphi 0, %s64
      %s67 = sphi 0, %s66
      %s81 = sphi 0, %s67
      %s87 = sphi 0, %s89
      %s90 = sphi 0, %s87
      %s91 = sphi 0, %s90
      %s107 = sphi 0, %s91
    $region4: #{layernorm4d_pallas.1} parent=1 // loop_header_branch
      %12 = sbr.rel (%p10) target = $region8
    $region5: #{layernorm4d_pallas.1} parent=1 // loop_body
      %s14 = ssub.s32 %s9, 1
      %s15 = ssub.s32 %s9, 2
      %s16 = sadd.s32 %s9, 1
      %s17 = ssub.s32 %s9, %s16
      %p18 = scmp.eq.s32.totalorder %s17, 0
      %s20 = sadd.s32 %s19, 1
      %s21 = scalar_select %p18, %s19, %s20
      %p24 = pneg %p18
      %p25 = scmp.eq.s32.totalorder %s9, 1
      %p26 = por %p24, %p25
      %p27 = scmp.ne.s32.totalorder %s19, %s22
      %p28 = scmp.eq.s32.totalorder %s9, 0
      %p29 = por %p27, %p28
      %p30 = scmp.ne.s32.totalorder %s19, %s22
      %p31 = scmp.eq.s32.totalorder %s14, 1
      %p32 = por %p30, %p31
      %p33 = scmp.ne.s32.totalorder %s22, %s23
      %p34 = scmp.eq.s32.totalorder %s14, 0
      %p35 = por %p33, %p34
      %p36 = scmp.ne.s32.totalorder %s22, %s23
      %p37 = scmp.eq.s32.totalorder %s15, 1
      %p38 = por %p36, %p37
      %p40 = scmp.ne.s32.totalorder %s23, %s39
      %p41 = scmp.eq.s32.totalorder %s15, 0
      %p42 = por %p40, %p41
      %s44 = sadd.s32 %s43, 1
      %p47 = scmp.eq.s32.totalorder %s9, 1
      %p48 = scmp.ne.s32.totalorder %s43, %s45
      %p49 = scmp.eq.s32.totalorder %s9, 0
      %p50 = por %p48, %p49
      %p51 = scmp.ne.s32.totalorder %s43, %s45
      %p52 = scmp.eq.s32.totalorder %s14, 1
      %p53 = por %p51, %p52
      %p54 = scmp.ne.s32.totalorder %s45, %s46
      %p55 = scmp.eq.s32.totalorder %s14, 0
      %p56 = por %p54, %p55
      %p57 = scmp.ne.s32.totalorder %s45, %s46
      %p58 = scmp.eq.s32.totalorder %s15, 1
      %p59 = por %p57, %p58
      %p61 = scmp.ne.s32.totalorder %s46, %s60
      %p62 = scmp.eq.s32.totalorder %s15, 0
      %p63 = por %p61, %p62
      %s65 = sadd.s32 %s64, 1
      %p68 = scmp.eq.s32.totalorder %s9, 1
      %p69 = scmp.ne.s32.totalorder %s64, %s66
      %p70 = scmp.eq.s32.totalorder %s9, 0
      %p71 = por %p69, %p70
      %p72 = scmp.ne.s32.totalorder %s64, %s66
      %p73 = scmp.eq.s32.totalorder %s14, 1
      %p74 = por %p72, %p73
      %p75 = scmp.ne.s32.totalorder %s66, %s67
      %p76 = scmp.eq.s32.totalorder %s14, 0
      %p77 = por %p75, %p76
      %p78 = scmp.ne.s32.totalorder %s66, %s67
      %p79 = scmp.eq.s32.totalorder %s15, 1
      %p80 = por %p78, %p79
      %p82 = scmp.ne.s32.totalorder %s67, %s81
      %p83 = scmp.eq.s32.totalorder %s15, 0
      %p84 = por %p82, %p83
      %s85 = ssub.s32 %s9, %s16
      %p86 = scmp.eq.s32.totalorder %s85, 0
      %s88 = sadd.s32 %s87, 1
      %s89 = scalar_select %p86, %s87, %s88
      %p92 = pneg %p86
      %p93 = scmp.eq.s32.totalorder %s9, 1
      %p94 = por %p92, %p93
      %p95 = scmp.ne.s32.totalorder %s87, %s90
      %p96 = scmp.eq.s32.totalorder %s9, 0
      %p97 = por %p95, %p96
      %p98 = scmp.ne.s32.totalorder %s87, %s90
      %p99 = scmp.eq.s32.totalorder %s14, 1
      %p100 = por %p98, %p99
      %p101 = scmp.ne.s32.totalorder %s90, %s91
      %p102 = scmp.eq.s32.totalorder %s14, 0
      %p103 = por %p101, %p102
      %p104 = scmp.ne.s32.totalorder %s90, %s91
      %p105 = scmp.eq.s32.totalorder %s15, 1
      %p106 = por %p104, %p105
      %p108 = scmp.ne.s32.totalorder %s91, %s107
      %p109 = scmp.eq.s32.totalorder %s15, 0
      %p110 = por %p108, %p109
      %p111 = scmp.le.s32.totalorder 1, %s9
      %p112 = scmp.lt.s32.totalorder %s9, 3
      %p113 = pnand %p111, %p112
      %p114 = pneg %p113
      // Predicated region
      $region9: #{layernorm4d_pallas.1} parent=5 // pred_check
        _
      $region10: #{layernorm4d_pallas.1} parent=5 // pred_check_branch
        %116 = sbr.rel (%p113) target = $region12
      $region11: #{layernorm4d_pallas.1} parent=5 // pred_region
        %s117 = ssub.s32 %s9, 1
        // Predicated region
        $region13: #{layernorm4d_pallas.1} parent=11 // pred_check
          %p118 = pneg %p56
        $region14: #{layernorm4d_pallas.1} parent=11 // pred_check_branch
          %120 = sbr.rel (%p118) target = $region16
        $region15: #{layernorm4d_pallas.1} parent=11 // pred_region
          _
        $region16: #{layernorm4d_pallas.1} parent=11 // pred_fallthru
          _
        // Predicated region
        $region17: #{layernorm4d_pallas.1} parent=11 // pred_check
          %p121 = pneg %p77
        $region18: #{layernorm4d_pallas.1} parent=11 // pred_check_branch
          %123 = sbr.rel (%p121) target = $region20
        $region19: #{layernorm4d_pallas.1} parent=11 // pred_region
          _
        $region20: #{layernorm4d_pallas.1} parent=11 // pred_fallthru
          _
      $region12: #{layernorm4d_pallas.1} parent=5 // pred_fallthru
        _
      %p124 = scmp.lt.s32.totalorder %s9, 2
      // Predicated region
      $region21: #{layernorm4d_pallas.1} parent=5 // pred_check
        %p125 = pneg %p124
      $region22: #{layernorm4d_pallas.1} parent=5 // pred_check_branch
        %127 = sbr.rel (%p125) target = $region24
      $region23: #{layernorm4d_pallas.1} parent=5 // pred_region
        // Predicated region
        $region25: #{layernorm4d_pallas.1} parent=23 // pred_check
          %p128 = pneg %p29
        $region26: #{layernorm4d_pallas.1} parent=23 // pred_check_branch
          %130 = sbr.rel (%p128) target = $region28
        $region27: #{layernorm4d_pallas.1} parent=23 // pred_region
          %s131 = sand.u32 %s19, 1
          %s132 = sand.u32 %s19, 1
          %s133 = smul.addr %s132, 64
          %s134 = scalar_lea.vmem [#allocation2], %s133
          %s135 = smul.addr %s9, 8
          %s136 = scalar_lea.vmem %s0, %s135
          // Predicated region
          $region29: #{layernorm4d_pallas.1} parent=27 // pred_check
            _
          $region30: #{layernorm4d_pallas.1} parent=27 // pred_check_branch
            %138 = sbr.rel (0) target = $region32
          $region31: #{layernorm4d_pallas.1} parent=27 // pred_region
            // Predicated region
            $region33: #{layernorm4d_pallas.1} parent=31 // pred_check
              _
            $region34: #{layernorm4d_pallas.1} parent=31 // pred_check_branch
              %140 = sbr.rel (0) target = $region36
            $region35: #{layernorm4d_pallas.1} parent=31 // pred_region
              // Predicated region
              $region48: #{layernorm4d_pallas.1} parent=35 // pred_check
                _
              $region49: #{layernorm4d_pallas.1} parent=35 // pred_check_branch
                %169 = sbr.rel (0) target = $region51
              $region50: #{layernorm4d_pallas.1} parent=35 // pred_region
                loop: start=0, step=1, limit=1
                $region52: #{layernorm4d_pallas.1} parent=50 // loop_pre_header
                  _
                $region53: #{layernorm4d_pallas.1} parent=50 // loop_header
                  %s171 = sphi 0, %s175
                  %p172 = scmp.ge.s32.totalorder %s171, 1
                  %s176 = sphi %s136, %s136
                  %s177 = sphi %s134, %s134
                $region54: #{layernorm4d_pallas.1} parent=50 // loop_header_branch
                  %174 = sbr.rel (%p172) target = $region58
                $region55: #{layernorm4d_pallas.1} parent=50 // loop_body
                  %v178 = vld [vmem:[%s176] sm:$0xff]
                  %179 = vst [vmem:[%s177] sm:$0xff] %v178
                  %v180 = vld [vmem:[%s176 + $0x10] sm:$0xff]
                  %181 = vst [vmem:[%s177 + $0x8] sm:$0xff] %v180
                  %v182 = vld [vmem:[%s176 + $0x20] sm:$0xff]
                  %183 = vst [vmem:[%s177 + $0x10] sm:$0xff] %v182
                  %v184 = vld [vmem:[%s176 + $0x30] sm:$0xff]
                  %185 = vst [vmem:[%s177 + $0x18] sm:$0xff] %v184
                  %v186 = vld [vmem:[%s176 + $0x40] sm:$0xff]
                  %187 = vst [vmem:[%s177 + $0x20] sm:$0xff] %v186
                  %v188 = vld [vmem:[%s176 + $0x50] sm:$0xff]
                  %189 = vst [vmem:[%s177 + $0x28] sm:$0xff] %v188
                  %v190 = vld [vmem:[%s176 + $0x60] sm:$0xff]
                  %191 = vst [vmem:[%s177 + $0x30] sm:$0xff] %v190
                  %v192 = vld [vmem:[%s176 + $0x70] sm:$0xff]
                  %193 = vst [vmem:[%s177 + $0x38] sm:$0xff] %v192
                $region56: #{layernorm4d_pallas.1} parent=50 // loop_footer
                  %s175 = sadd.s32 1, %s171
                $region57: #{layernorm4d_pallas.1} parent=50 // loop_footer_branch
                  %170 = sbr.rel target = $region53
                $region58: #{layernorm4d_pallas.1} parent=50 // loop_exit
                  _
              $region51: #{layernorm4d_pallas.1} parent=35 // pred_fallthru
                _
              // Predicated region
              $region59: #{layernorm4d_pallas.1} parent=35 // pred_check
                _
              $region60: #{layernorm4d_pallas.1} parent=35 // pred_check_branch
                %195 = sbr.rel target = $region62
              $region61: #{layernorm4d_pallas.1} parent=35 // pred_region
                _
              $region62: #{layernorm4d_pallas.1} parent=35 // pred_fallthru
                _
            $region36: #{layernorm4d_pallas.1} parent=31 // pred_fallthru
              _
            // Predicated region
            $region37: #{layernorm4d_pallas.1} parent=31 // pred_check
              _
            $region38: #{layernorm4d_pallas.1} parent=31 // pred_check_branch
              %142 = sbr.rel target = $region40
            $region39: #{layernorm4d_pallas.1} parent=31 // pred_region
              loop: start=0, step=1, limit=1
              $region41: #{layernorm4d_pallas.1} parent=39 // loop_pre_header
                _
              $region42: #{layernorm4d_pallas.1} parent=39 // loop_header
                %s145 = sphi 0, %s149
                %p146 = scmp.ge.s32.totalorder %s145, 1
                %s150 = sphi %s136, %s136
                %s151 = sphi %s134, %s134
              $region43: #{layernorm4d_pallas.1} parent=39 // loop_header_branch
                %148 = sbr.rel (%p146) target = $region47
              $region44: #{layernorm4d_pallas.1} parent=39 // loop_body
                %v152 = vld [vmem:[%s150] sm:$0xff]
                %153 = vst [vmem:[%s151] sm:$0xff] %v152
                %v154 = vld [vmem:[%s150 + $0x10] sm:$0xff]
                %155 = vst [vmem:[%s151 + $0x8] sm:$0xff] %v154
                %v156 = vld [vmem:[%s150 + $0x20] sm:$0xff]
                %157 = vst [vmem:[%s151 + $0x10] sm:$0xff] %v156
                %v158 = vld [vmem:[%s150 + $0x30] sm:$0xff]
                %159 = vst [vmem:[%s151 + $0x18] sm:$0xff] %v158
                %v160 = vld [vmem:[%s150 + $0x40] sm:$0xff]
                %161 = vst [vmem:[%s151 + $0x20] sm:$0xff] %v160
                %v162 = vld [vmem:[%s150 + $0x50] sm:$0xff]
                %163 = vst [vmem:[%s151 + $0x28] sm:$0xff] %v162
                %v164 = vld [vmem:[%s150 + $0x60] sm:$0xff]
                %165 = vst [vmem:[%s151 + $0x30] sm:$0xff] %v164
                %v166 = vld [vmem:[%s150 + $0x70] sm:$0xff]
                %167 = vst [vmem:[%s151 + $0x38] sm:$0xff] %v166
              $region45: #{layernorm4d_pallas.1} parent=39 // loop_footer
                %s149 = sadd.s32 1, %s145
              $region46: #{layernorm4d_pallas.1} parent=39 // loop_footer_branch
                %144 = sbr.rel target = $region42
              $region47: #{layernorm4d_pallas.1} parent=39 // loop_exit
                _
            $region40: #{layernorm4d_pallas.1} parent=31 // pred_fallthru
              _
          $region32: #{layernorm4d_pallas.1} parent=27 // pred_fallthru
            _
          %196 = vnop
        $region28: #{layernorm4d_pallas.1} parent=23 // pred_fallthru
          _
      $region24: #{layernorm4d_pallas.1} parent=5 // pred_fallthru
        _
      %p197 = scmp.le.s32.totalorder 1, %s9
      %p198 = scmp.lt.s32.totalorder %s9, 3
      %p199 = pnand %p197, %p198
      %p200 = pneg %p199
      // Predicated region
      $region63: #{layernorm4d_pallas.1} parent=5 // pred_check
        _
      $region64: #{layernorm4d_pallas.1} parent=5 // pred_check_branch
        %202 = sbr.rel (%p199) target = $region66
      $region65: #{layernorm4d_pallas.1} parent=5 // pred_region
        %s203 = ssub.s32 %s9, 1
        %s204 = sand.u32 %s22, 1
        %s205 = sand.u32 %s22, 1
        %s206 = smul.addr %s205, 64
        %s207 = scalar_lea.vmem [#allocation2], %s206
        // Predicated region
        $region67: #{layernorm4d_pallas.1} parent=65 // pred_check
          %p208 = pneg %p35
        $region68: #{layernorm4d_pallas.1} parent=65 // pred_check_branch
          %210 = sbr.rel (%p208) target = $region70
        $region69: #{layernorm4d_pallas.1} parent=65 // pred_region
          _
        $region70: #{layernorm4d_pallas.1} parent=65 // pred_fallthru
          _
        %s211 = sand.u32 %s22, 1
        %s212 = sand.u32 %s22, 1
        %s213 = smul.addr %s212, 64
        %s214 = scalar_lea.vmem [#allocation2], %s213
        %p215 = pneg %p35
        %p216 = pneg %p32
        %p217 = pneg %p56
        %p218 = pneg %p53
        %p219 = pneg %p77
        %p220 = pneg %p74
        %p221 = pneg %p103
        %p222 = pneg %p100
        %s223 = sand.u32 %s90, 1
        %s224 = sand.u32 %s90, 1
        %s225 = smul.addr %s224, 64
        %s226 = scalar_lea.vmem [#allocation3], %s225
        %v227 = vld [vmem:[%s207] sm:$0xff]
        %v228 = vld [vmem:[%s207 + $0x8] sm:$0xff]
        %v229 = vld [vmem:[%s207 + $0x10] sm:$0xff]
        %v230 = vld [vmem:[%s207 + $0x18] sm:$0xff]
        %v231 = vld [vmem:[%s207 + $0x20] sm:$0xff]
        %v232 = vld [vmem:[%s207 + $0x28] sm:$0xff]
        %v233 = vld [vmem:[%s207 + $0x30] sm:$0xff]
        %v234 = vld [vmem:[%s207 + $0x38] sm:$0xff]
        %v235 = vadd.f32 %v227, %v228
        %v236 = vadd.f32 %v235, %v229
        %v237 = vadd.f32 %v236, %v230
        %v238 = vrot.slane %v237, 4
        %v239 = vadd.f32 %v237, %v238
        %v240 = vrot.slane %v239, 2
        %v241 = vadd.f32 %v239, %v240
        %v242 = vrot.slane %v241, 1
        %v243 = vadd.f32 %v241, %v242
        %v244 = vadd.f32 %v231, %v232
        %v245 = vadd.f32 %v244, %v233
        %v246 = vadd.f32 %v245, %v234
        %v247 = vrot.slane %v246, 4
        %v248 = vadd.f32 %v246, %v247
        %v249 = vrot.slane %v248, 2
        %v250 = vadd.f32 %v248, %v249
        %v251 = vrot.slane %v250, 1
        %v252 = vadd.f32 %v250, %v251
        %v253 = vrcp.pop 32.0
        %v254 = vmul.f32 %v243, %v253
        %v255 = vmul.f32 %v252, %v253
        %v256 = vsub.f32 %v227, %v254
        %v257 = vsub.f32 %v228, %v254
        %v258 = vsub.f32 %v229, %v254
        %v259 = vsub.f32 %v230, %v254
        %v260 = vsub.f32 %v231, %v255
        %v261 = vsub.f32 %v232, %v255
        %v262 = vsub.f32 %v233, %v255
        %v263 = vsub.f32 %v234, %v255
        %v264 = vmul.f32 %v256, %v256
        %v265 = vmul.f32 %v257, %v257
        %v266 = vmul.f32 %v258, %v258
        %v267 = vmul.f32 %v259, %v259
        %v268 = vmul.f32 %v260, %v260
        %v269 = vmul.f32 %v261, %v261
        %v270 = vmul.f32 %v262, %v262
        %v271 = vmul.f32 %v263, %v263
        %v272 = vadd.f32 %v264, %v265
        %v273 = vadd.f32 %v272, %v266
        %v274 = vadd.f32 %v273, %v267
        %v275 = vrot.slane %v274, 4
        %v276 = vadd.f32 %v274, %v275
        %v277 = vrot.slane %v276, 2
        %v278 = vadd.f32 %v276, %v277
        %v279 = vrot.slane %v278, 1
        %v280 = vadd.f32 %v278, %v279
        %v281 = vadd.f32 %v268, %v269
        %v282 = vadd.f32 %v281, %v270
        %v283 = vadd.f32 %v282, %v271
        %v284 = vrot.slane %v283, 4
        %v285 = vadd.f32 %v283, %v284
        %v286 = vrot.slane %v285, 2
        %v287 = vadd.f32 %v285, %v286
        %v288 = vrot.slane %v287, 1
        %v289 = vadd.f32 %v287, %v288
        %v290 = vmul.f32 %v280, %v253
        %v291 = vmul.f32 %v289, %v253
        %v292 = vadd.f32 %v290, 1e-05
        %v293 = vadd.f32 %v291, 1e-05
        %v294 = vrsqrt.pop %v292
        %v295 = vrsqrt.pop %v293
        %v296 = vmul.f32 %v256, %v294
        %v297 = vmul.f32 %v257, %v294
        %v298 = vmul.f32 %v258, %v294
        %v299 = vmul.f32 %v259, %v294
        %v300 = vmul.f32 %v260, %v295
        %v301 = vmul.f32 %v261, %v295
        %v302 = vmul.f32 %v262, %v295
        %v303 = vmul.f32 %v263, %v295
        %v304 = vld [vmem:[%s1] sm:$0xff]
        %v305 = vld [vmem:[%s1 + $0x8] sm:$0xff]
        %v306 = vld [vmem:[%s1 + $0x10] sm:$0xff]
        %v307 = vld [vmem:[%s1 + $0x18] sm:$0xff]
        %309 = vset.pattern.permute.xlu0 0
        %310 = vperm.xlu0 %309, %v304
        %v311 = vpop.permute.xlu0 %310
        %314 = vset.pattern.permute.xlu0 0
        %315 = vperm.xlu0 %314, %v305
        %v316 = vpop.permute.xlu0 %315
        %319 = vset.pattern.permute.xlu0 0
        %320 = vperm.xlu0 %319, %v306
        %v321 = vpop.permute.xlu0 %320
        %324 = vset.pattern.permute.xlu0 0
        %325 = vperm.xlu0 %324, %v307
        %v326 = vpop.permute.xlu0 %325
        %v328 = vmul.f32 %v311, %v296
        %v329 = vmul.f32 %v316, %v297
        %v330 = vmul.f32 %v321, %v298
        %v331 = vmul.f32 %v326, %v299
        %v332 = vmul.f32 %v311, %v300
        %v333 = vmul.f32 %v316, %v301
        %v334 = vmul.f32 %v321, %v302
        %v335 = vmul.f32 %v326, %v303
        %v336 = vld [vmem:[%s2] sm:$0xff]
        %v337 = vld [vmem:[%s2 + $0x8] sm:$0xff]
        %v338 = vld [vmem:[%s2 + $0x10] sm:$0xff]
        %v339 = vld [vmem:[%s2 + $0x18] sm:$0xff]
        %341 = vset.pattern.permute.xlu0 0
        %342 = vperm.xlu0 %341, %v336
        %v343 = vpop.permute.xlu0 %342
        %346 = vset.pattern.permute.xlu0 0
        %347 = vperm.xlu0 %346, %v337
        %v348 = vpop.permute.xlu0 %347
        %351 = vset.pattern.permute.xlu0 0
        %352 = vperm.xlu0 %351, %v338
        %v353 = vpop.permute.xlu0 %352
        %356 = vset.pattern.permute.xlu0 0
        %357 = vperm.xlu0 %356, %v339
        %v358 = vpop.permute.xlu0 %357
        %v360 = vadd.f32 %v328, %v343
        %v361 = vadd.f32 %v329, %v348
        %v362 = vadd.f32 %v330, %v353
        %v363 = vadd.f32 %v331, %v358
        %v364 = vadd.f32 %v332, %v343
        %v365 = vadd.f32 %v333, %v348
        %v366 = vadd.f32 %v334, %v353
        %v367 = vadd.f32 %v335, %v358
        %368 = vst [vmem:[%s226] sm:$0xff] %v360
        %369 = vst [vmem:[%s226 + $0x8] sm:$0xff] %v361
        %370 = vst [vmem:[%s226 + $0x10] sm:$0xff] %v362
        %371 = vst [vmem:[%s226 + $0x18] sm:$0xff] %v363
        %372 = vst [vmem:[%s226 + $0x20] sm:$0xff] %v364
        %373 = vst [vmem:[%s226 + $0x28] sm:$0xff] %v365
        %374 = vst [vmem:[%s226 + $0x30] sm:$0xff] %v366
        %375 = vst [vmem:[%s226 + $0x38] sm:$0xff] %v367
        %s376 = sand.u32 %s90, 1
        %s377 = sand.u32 %s90, 1
        %s378 = smul.addr %s377, 64
        %s379 = scalar_lea.vmem [#allocation3], %s378
        // Predicated region
        $region71: #{layernorm4d_pallas.1} parent=65 // pred_check
          %p380 = pneg %p100
        $region72: #{layernorm4d_pallas.1} parent=65 // pred_check_branch
          %382 = sbr.rel (%p380) target = $region74
        $region73: #{layernorm4d_pallas.1} parent=65 // pred_region
          %s383 = smul.addr %s14, 8
          %s384 = scalar_lea.vmem %s3, %s383
          // Predicated region
          $region75: #{layernorm4d_pallas.1} parent=73 // pred_check
            _
          $region76: #{layernorm4d_pallas.1} parent=73 // pred_check_branch
            %386 = sbr.rel (0) target = $region78
          $region77: #{layernorm4d_pallas.1} parent=73 // pred_region
            // Predicated region
            $region79: #{layernorm4d_pallas.1} parent=77 // pred_check
              _
            $region80: #{layernorm4d_pallas.1} parent=77 // pred_check_branch
              %388 = sbr.rel (0) target = $region82
            $region81: #{layernorm4d_pallas.1} parent=77 // pred_region
              // Predicated region
              $region94: #{layernorm4d_pallas.1} parent=81 // pred_check
                _
              $region95: #{layernorm4d_pallas.1} parent=81 // pred_check_branch
                %417 = sbr.rel (0) target = $region97
              $region96: #{layernorm4d_pallas.1} parent=81 // pred_region
                loop: start=0, step=1, limit=1
                $region98: #{layernorm4d_pallas.1} parent=96 // loop_pre_header
                  _
                $region99: #{layernorm4d_pallas.1} parent=96 // loop_header
                  %s419 = sphi 0, %s423
                  %p420 = scmp.ge.s32.totalorder %s419, 1
                  %s424 = sphi %s379, %s379
                  %s425 = sphi %s384, %s384
                $region100: #{layernorm4d_pallas.1} parent=96 // loop_header_branch
                  %422 = sbr.rel (%p420) target = $region104
                $region101: #{layernorm4d_pallas.1} parent=96 // loop_body
                  %v426 = vld [vmem:[%s424] sm:$0xff]
                  %427 = vst [vmem:[%s425] sm:$0xff] %v426
                  %v428 = vld [vmem:[%s424 + $0x8] sm:$0xff]
                  %429 = vst [vmem:[%s425 + $0x10] sm:$0xff] %v428
                  %v430 = vld [vmem:[%s424 + $0x10] sm:$0xff]
                  %431 = vst [vmem:[%s425 + $0x20] sm:$0xff] %v430
                  %v432 = vld [vmem:[%s424 + $0x18] sm:$0xff]
                  %433 = vst [vmem:[%s425 + $0x30] sm:$0xff] %v432
                  %v434 = vld [vmem:[%s424 + $0x20] sm:$0xff]
                  %435 = vst [vmem:[%s425 + $0x40] sm:$0xff] %v434
                  %v436 = vld [vmem:[%s424 + $0x28] sm:$0xff]
                  %437 = vst [vmem:[%s425 + $0x50] sm:$0xff] %v436
                  %v438 = vld [vmem:[%s424 + $0x30] sm:$0xff]
                  %439 = vst [vmem:[%s425 + $0x60] sm:$0xff] %v438
                  %v440 = vld [vmem:[%s424 + $0x38] sm:$0xff]
                  %441 = vst [vmem:[%s425 + $0x70] sm:$0xff] %v440
                $region102: #{layernorm4d_pallas.1} parent=96 // loop_footer
                  %s423 = sadd.s32 1, %s419
                $region103: #{layernorm4d_pallas.1} parent=96 // loop_footer_branch
                  %418 = sbr.rel target = $region99
                $region104: #{layernorm4d_pallas.1} parent=96 // loop_exit
                  _
              $region97: #{layernorm4d_pallas.1} parent=81 // pred_fallthru
                _
              // Predicated region
              $region105: #{layernorm4d_pallas.1} parent=81 // pred_check
                _
              $region106: #{layernorm4d_pallas.1} parent=81 // pred_check_branch
                %443 = sbr.rel target = $region108
              $region107: #{layernorm4d_pallas.1} parent=81 // pred_region
                _
              $region108: #{layernorm4d_pallas.1} parent=81 // pred_fallthru
                _
            $region82: #{layernorm4d_pallas.1} parent=77 // pred_fallthru
              _
            // Predicated region
            $region83: #{layernorm4d_pallas.1} parent=77 // pred_check
              _
            $region84: #{layernorm4d_pallas.1} parent=77 // pred_check_branch
              %390 = sbr.rel target = $region86
            $region85: #{layernorm4d_pallas.1} parent=77 // pred_region
              loop: start=0, step=1, limit=1
              $region87: #{layernorm4d_pallas.1} parent=85 // loop_pre_header
                _
              $region88: #{layernorm4d_pallas.1} parent=85 // loop_header
                %s393 = sphi 0, %s397
                %p394 = scmp.ge.s32.totalorder %s393, 1
                %s398 = sphi %s379, %s379
                %s399 = sphi %s384, %s384
              $region89: #{layernorm4d_pallas.1} parent=85 // loop_header_branch
                %396 = sbr.rel (%p394) target = $region93
              $region90: #{layernorm4d_pallas.1} parent=85 // loop_body
                %v400 = vld [vmem:[%s398] sm:$0xff]
                %401 = vst [vmem:[%s399] sm:$0xff] %v400
                %v402 = vld [vmem:[%s398 + $0x8] sm:$0xff]
                %403 = vst [vmem:[%s399 + $0x10] sm:$0xff] %v402
                %v404 = vld [vmem:[%s398 + $0x10] sm:$0xff]
                %405 = vst [vmem:[%s399 + $0x20] sm:$0xff] %v404
                %v406 = vld [vmem:[%s398 + $0x18] sm:$0xff]
                %407 = vst [vmem:[%s399 + $0x30] sm:$0xff] %v406
                %v408 = vld [vmem:[%s398 + $0x20] sm:$0xff]
                %409 = vst [vmem:[%s399 + $0x40] sm:$0xff] %v408
                %v410 = vld [vmem:[%s398 + $0x28] sm:$0xff]
                %411 = vst [vmem:[%s399 + $0x50] sm:$0xff] %v410
                %v412 = vld [vmem:[%s398 + $0x30] sm:$0xff]
                %413 = vst [vmem:[%s399 + $0x60] sm:$0xff] %v412
                %v414 = vld [vmem:[%s398 + $0x38] sm:$0xff]
                %415 = vst [vmem:[%s399 + $0x70] sm:$0xff] %v414
              $region91: #{layernorm4d_pallas.1} parent=85 // loop_footer
                %s397 = sadd.s32 1, %s393
              $region92: #{layernorm4d_pallas.1} parent=85 // loop_footer_branch
                %392 = sbr.rel target = $region88
              $region93: #{layernorm4d_pallas.1} parent=85 // loop_exit
                _
            $region86: #{layernorm4d_pallas.1} parent=77 // pred_fallthru
              _
          $region78: #{layernorm4d_pallas.1} parent=73 // pred_fallthru
            _
          %444 = vnop
        $region74: #{layernorm4d_pallas.1} parent=65 // pred_fallthru
          _
      $region66: #{layernorm4d_pallas.1} parent=5 // pred_fallthru
        _
      %p445 = scmp.le.s32.totalorder 2, %s9
      // Predicated region
      $region109: #{layernorm4d_pallas.1} parent=5 // pred_check
        %p446 = pneg %p445
      $region110: #{layernorm4d_pallas.1} parent=5 // pred_check_branch
        %448 = sbr.rel (%p446) target = $region112
      $region111: #{layernorm4d_pallas.1} parent=5 // pred_region
        %s449 = ssub.s32 %s9, 2
        // Predicated region
        $region113: #{layernorm4d_pallas.1} parent=111 // pred_check
          %p450 = pneg %p106
        $region114: #{layernorm4d_pallas.1} parent=111 // pred_check_branch
          %452 = sbr.rel (%p450) target = $region116
        $region115: #{layernorm4d_pallas.1} parent=111 // pred_region
          %s453 = sand.u32 %s91, 1
          %s454 = sand.u32 %s91, 1
          %s455 = smul.addr %s454, 64
          %s456 = scalar_lea.vmem [#allocation3], %s455
        $region116: #{layernorm4d_pallas.1} parent=111 // pred_fallthru
          _
      $region112: #{layernorm4d_pallas.1} parent=5 // pred_fallthru
        _
    $region6: #{layernorm4d_pallas.1} parent=1 // loop_footer
      %s13 = sadd.s32 1, %s9
    $region7: #{layernorm4d_pallas.1} parent=1 // loop_footer_branch
      %8 = sbr.rel target = $region3
    $region8: #{layernorm4d_pallas.1} parent=1 // loop_exit
      _

</llo_original>
